<compile_context>
chip_gen: v5e
topology: v5e:2x2
jax: 0.10.0
libtpu: 0.0.40
codegen_flags: <defaults>
</compile_context>

<pallas_src>
import functools

import jax
import jax.numpy as jnp
from jax.experimental import pallas as pl
from jax.experimental.pallas import tpu as pltpu


def _cdiv(a, b):
    return -(-a // b)


def _round_up(a, b):
    return _cdiv(a, b) * b


def _round_down(a, b):
    return (a // b) * b


def _tpu_vmem_bytes():
    try:
        v = getattr(pltpu.get_tpu_info(), "vmem_capacity_bytes", None)
        if v:
            return int(v)
    except Exception:
        pass
    return 64 * 1024 * 1024  # conservative fallback (v7x-sized VMEM)


def _tpu_num_tensorcores():
    """TensorCores visible to one Pallas program (2 only on megacore parts)."""
    try:
        info = pltpu.get_tpu_info()
        for name in ("num_cores", "num_tensorcores", "tensor_core_count",
                     "core_count"):
            v = getattr(info, name, None)
            if isinstance(v, int) and v > 0:
                return int(v)
    except Exception:
        pass
    try:
        kind = jax.devices()[0].device_kind.lower()
    except Exception:
        kind = ""
    if "lite" in kind or "v5e" in kind or "v6e" in kind:
        return 1  # v5e / v6e: one TensorCore -> shard axis is pure overhead
    if any(t in kind for t in ("v4", "v5p", "v7", "7x")):
        return 2  # megacore-style parts
    return 1      # unknown -> safe default (only disables the shard axis)


def _seg_sum(x, sel):
    """Segmented lane sums via the (otherwise idle) MXU.

    `sel` is an exact 0/1 selector.  Splitting x into a bf16-exact high part
    plus a small residual keeps the result accurate to ~2^-16 relative even if
    the f32 matmul is lowered as a single bf16 pass.
    """
    hi = x.astype(jnp.bfloat16).astype(jnp.float32)
    lo = x - hi
    return (jnp.dot(hi, sel, preferred_element_type=jnp.float32) +
            jnp.dot(lo, sel, preferred_element_type=jnp.float32))


def _kd_kernel(pred_ref, soft_ref, acc_ref, rowc_ref, *, inv_temperature,
               packed, seg, n_valid_rows, blocks_per_shard, needs_mask):
    """Accumulate per-lane KL partial sums into VMEM-resident accumulators."""
    s = pl.program_id(0)      # (optional) core-parallel shard over row-blocks
    i = pl.program_id(1)      # sequential reduction over row-blocks

    @pl.when(i == 0)
    def _():
        acc_ref[...] = jnp.zeros_like(acc_ref)
        rowc_ref[...] = jnp.zeros_like(rowc_ref)

    inv_t = jnp.float32(inv_temperature)
    p = pred_ref[...].astype(jnp.float32) * inv_t        # pred / T
    q = soft_ref[...].astype(jnp.float32) * inv_t        # soft_label / T
    rows, lanes = p.shape

    p_shift = p - jnp.max(p, axis=-1, keepdims=True)
    q_shift = q - jnp.max(q, axis=-1, keepdims=True)
    ep = jnp.exp(p_shift)
    eq = jnp.exp(q_shift)

    if packed:
        # ---- lane-packed small-C path -------------------------------------
        # Each kernel row holds k = lanes // seg logical rows side by side.
        # The shared per-kernel-row max is a valid softmax shift for every
        # packed segment (it is >= all segment values and identical across a
        # segment), and it cancels exactly in the folded KL expression.
        td = eq * (q_shift - p_shift)

        # Selector: out[r, seg_start(a)] += x[r, a]; all other lanes stay 0.
        a_idx = jax.lax.broadcasted_iota(jnp.int32, (lanes, lanes), 0)
        o_idx = jax.lax.broadcasted_iota(jnp.int32, (lanes, lanes), 1)
        sel = (o_idx == (a_idx // seg) * seg).astype(jnp.float32)

        sp = _seg_sum(ep, sel)      # per-segment sum exp(p_shift)
        sq = _seg_sum(eq, sel)      # per-segment sum exp(q_shift)
        ts = _seg_sum(td, sel)      # per-segment sum eq * (q_shift - p_shift)

        lane_idx = jax.lax.broadcasted_iota(jnp.int32, (rows, lanes), 1)
        is_rep = (lane_idx % seg) == 0
        one = jnp.float32(1.0)
        # Clamp keeps a (practically impossible) fully-underflowed segment
        # finite instead of poisoning the sum with 0*inf / log(0).
        sp_m = jnp.maximum(jnp.where(is_rep, sp, one), 1e-30)
        sq_m = jnp.maximum(jnp.where(is_rep, sq, one), 1e-30)
        contrib = (ts * pl.reciprocal(sq_m, approx=True)
                   + (jnp.log(sp_m) - jnp.log(sq_m)))
        # contrib is exactly 0 at non-representative lanes.
        row_const = None
    else:
        # ---- generic path (per-class lane layout) --------------------------
        sp = jnp.sum(ep, axis=-1, keepdims=True)
        sq = jnp.sum(eq, axis=-1, keepdims=True)
        qn = eq * pl.reciprocal(sq, approx=True)
        contrib = qn * (q_shift - p_shift)               # per-class part of KL
        # sum_c softmax(q) == 1, so the log-sum-exp difference is a per-row
        # constant accumulated separately (saves one N*C broadcast add).
        row_const = jnp.log(sp) - jnp.log(sq)            # (rows, 1)

    def accumulate(keep):
        if keep is None:
            c, rc = contrib, row_const
        else:
            c = jnp.where(keep, contrib, 0.0)
            rc = None if row_const is None else jnp.where(keep, row_const, 0.0)
        # Sublane-only reduce per step; the cross-lane reduce is deferred to
        # the wrapper on a tiny (num_shards, 1, lanes) partial.
        acc_ref[...] += jnp.sum(c, axis=0, keepdims=True)[None]
        if rc is not None:
            rowc_ref[...] += jnp.sum(rc, axis=0, keepdims=True)[None]

    if needs_mask:
        row0 = (s * blocks_per_shard + i) * rows
        is_full = row0 + rows <= n_valid_rows

        @pl.when(is_full)
        def _():
            accumulate(None)                 # full tiles: no mask ops at all

        @pl.when(jnp.logical_not(is_full))
        def _():
            rid = row0 + jax.lax.broadcasted_iota(jnp.int32, (rows, 1), 0)
            accumulate(rid < n_valid_rows)   # select (not multiply): garbage
                                             # rows may hold NaN/Inf
    else:
        accumulate(None)


def distillation_loss_pallas(pred, soft_label, temperature=4.0,
                             max_block_rows=None, core_parallel=False):
    """Equivalent of DistillationLoss(reduction='mean', Temperature=T)(pred, soft_label)."""
    assert pred.shape == soft_label.shape and pred.ndim == 2
    assert temperature >= 1
    N, C = pred.shape
    isz_p = jnp.dtype(pred.dtype).itemsize
    isz_s = jnp.dtype(soft_label.dtype).itemsize

    # ---- lane packing for small class counts (C | 128) ---------------------
    # (N, C) -> (N/k, 128) is a zero-copy row-major reshape; each kernel row
    # then carries k logical rows, so per-element vector work drops ~k x.
    k = 1
    if 2 <= C <= 64 and 128 % C == 0 and N % (128 // C) == 0:
        k = 128 // C
    packed = k > 1
    if packed:
        rows_total, lanes = N // k, k * C
        x_p = pred.reshape(rows_total, lanes)
        x_s = soft_label.reshape(rows_total, lanes)
    else:
        rows_total, lanes = N, C
        x_p, x_s = pred, soft_label

    # ---- per-generation VMEM sizing ----------------------------------------
    phys_vmem = _tpu_vmem_bytes()                  # 128 MiB v5e/v6e, 64 MiB v7x
    lanes_pad = max(_round_up(lanes, 128), 128)

    # Bytes per kernel row: 2 inputs x 2 pipeline buffers in native dtype plus
    # an allowance for the in-kernel f32 temporaries (p, q, shifts, exps, ...).
    n_tmp = 8 if packed else 6
    per_row = 2 * (isz_p + isz_s) * lanes_pad + n_tmp * 4 * lanes_pad

    # A few-MiB input block already sits at the HBM roofline (~0.35 us/step
    # overhead is <5%); bigger tiles only add spill risk.  Tighter on 64 MiB
    # parts (v7x).
    blk_cap = 4 * 2**20 if phys_vmem > 96 * 2**20 else 2 * 2**20
    budget = min(phys_vmem // 4, 24 * 2**20)

    row_align = 8 * max(1, 4 // max(min(isz_p, isz_s), 1))   # 8 f32, 16 bf16
    max_rows = min(blk_cap // (max(isz_p, isz_s) * lanes_pad),
                   budget // per_row)
    max_rows = max(_round_down(max_rows, row_align), row_align)
    # TODO(synk): if C alone blows the VMEM budget (vocab-scale KD), tile the
    # class dim with a two-pass / online-logsumexp variant instead of rows.
    if max_block_rows is not None:
        cap = max(row_align, _round_down(int(max_block_rows), row_align))
        max_rows = max(row_align, min(max_rows, cap))

    block_rows = min(max_rows, _round_up(rows_total, row_align))
    total_blocks = _cdiv(rows_total, block_rows)

    # ---- shard axis only when a second TensorCore exists -------------------
    num_cores = _tpu_num_tensorcores()
    num_shards = 1
    if num_cores >= 2 and total_blocks >= 2:
        if total_blocks % 2 == 1:
            block_rows = min(max_rows,
                             max(row_align,
                                 _round_up(_cdiv(rows_total, total_blocks + 1),
                                           row_align)))
            total_blocks = _cdiv(rows_total, block_rows)
        if total_blocks % 2 == 0:
            num_shards = 2
    blocks_per_shard = total_blocks // num_shards
    needs_mask = (total_blocks * block_rows != rows_total)

    est_need = (2 * 2 * (isz_p + isz_s) * lanes_pad * block_rows
                + n_tmp * 4 * lanes_pad * block_rows
                + 8 * lanes_pad + 4096)
    vmem_cap = 48 * 2**20 if phys_vmem <= 64 * 2**20 else 96 * 2**20
    vmem_limit = int(min(vmem_cap, max(32 * 2**20, 2 * est_need)))

    def row_block_map(s, i):
        return (s * blocks_per_shard + i, 0)

    kernel = functools.partial(
        _kd_kernel,
        inv_temperature=1.0 / float(temperature),
        packed=bool(packed),
        seg=int(C),
        n_valid_rows=int(rows_total),
        blocks_per_shard=int(blocks_per_shard),
        needs_mask=bool(needs_mask),
    )

    cost = pl.CostEstimate(
        flops=16 * N * C,
        transcendentals=2 * N * C + 3 * rows_total,
        bytes_accessed=N * C * (isz_p + isz_s) + num_shards * (lanes + 1) * 4,
    )

    if core_parallel and num_shards == 2:
        # Opt-in: only worth flipping if a profile shows one v7x TC idle with
        # the plain "parallel" spelling.
        dim_sem = (pltpu.CORE_PARALLEL, pltpu.ARBITRARY)
    else:
        dim_sem = ("parallel", "arbitrary")

    acc, rowc = pl.pallas_call(
        kernel,
        out_shape=(jax.ShapeDtypeStruct((num_shards, 1, lanes), jnp.float32),
                   jax.ShapeDtypeStruct((num_shards, 1, 1), jnp.float32)),
        grid_spec=pltpu.PrefetchScalarGridSpec(
            num_scalar_prefetch=0,
            grid=(num_shards, blocks_per_shard),
            in_specs=[
                pl.BlockSpec((block_rows, lanes), row_block_map),
                pl.BlockSpec((block_rows, lanes), row_block_map),
            ],
            out_specs=[
                pl.BlockSpec((1, 1, lanes), lambda s, i: (s, 0, 0)),
                pl.BlockSpec((1, 1, 1), lambda s, i: (s, 0, 0)),
            ],
        ),
        compiler_params=pltpu.CompilerParams(
            dimension_semantics=dim_sem,
            vmem_limit_bytes=vmem_limit,
        ),
        cost_estimate=cost,
    )(x_p, x_s)

    # Final cross-lane / cross-shard reduce + T^2 / batch scaling (tiny, XLA).
    t = jnp.float32(temperature)
    return (jnp.sum(acc) + jnp.sum(rowc)) * (t * t) / jnp.float32(N)


def _reference(pred, soft_label, temperature=4.0):
    t = jnp.float32(temperature)
    p = jax.nn.log_softmax(pred.astype(jnp.float32) / t, axis=1)
    q = jax.nn.softmax(soft_label.astype(jnp.float32) / t, axis=1)
    kl = jnp.sum(q * (jnp.log(q) - p))
    return kl * t * t / pred.shape[0]


if __name__ == "__main__":
    key = jax.random.PRNGKey(0)
    k1, k2, k3, k4, k5, k6, k7, k8 = jax.random.split(key, 8)

    # Case 1: generic path (C=20 does not divide 128), small aligned batch.
    pred = jax.random.normal(k1, (8, 20), dtype=jnp.float32) * 3.0
    soft = jax.random.normal(k2, (8, 20), dtype=jnp.float32) * 3.0
    loss = jax.block_until_ready(distillation_loss_pallas(pred, soft, 4.0))
    ref = _reference(pred, soft, 4.0)
    assert jnp.allclose(loss, ref, rtol=5e-3, atol=1e-5), (loss, ref)

    # Case 2: generic path, ragged batch, several row blocks.
    pred = jax.random.normal(k3, (50, 20), dtype=jnp.float32) * 2.0
    soft = jax.random.normal(k4, (50, 20), dtype=jnp.float32) * 2.0
    loss = jax.block_until_ready(
        distillation_loss_pallas(pred, soft, 4.0, max_block_rows=16))
    ref = _reference(pred, soft, 4.0)
    assert jnp.allclose(loss, ref, rtol=5e-3, atol=1e-5), (loss, ref)

    # Case 3: lane-packed path (C=32 -> k=4), ragged packed rows, multi-block.
    pred = jax.random.normal(k5, (72, 32), dtype=jnp.float32) * 2.0
    soft = jax.random.normal(k6, (72, 32), dtype=jnp.float32) * 2.0
    loss = jax.block_until_ready(
        distillation_loss_pallas(pred, soft, 2.0, max_block_rows=8))
    ref = _reference(pred, soft, 2.0)
    assert jnp.allclose(loss, ref, rtol=5e-3, atol=1e-5), (loss, ref)

    # Case 4: bf16 logits streamed natively, lane-packed (C=64 -> k=2), ragged.
    pred = (jax.random.normal(k7, (48, 64), dtype=jnp.float32) * 2.0).astype(jnp.bfloat16)
    soft = (jax.random.normal(k8, (48, 64), dtype=jnp.float32) * 2.0).astype(jnp.bfloat16)
    loss = jax.block_until_ready(
        distillation_loss_pallas(pred, soft, 4.0, max_block_rows=16))
    ref = _reference(pred.astype(jnp.float32), soft.astype(jnp.float32), 4.0)
    assert jnp.allclose(loss, ref, rtol=5e-3, atol=1e-4), (loss, ref)

    print("KERNEL_OK")
</pallas_src>

<mosaic_0001>
module attributes {stable_mosaic.version = 11 : i64} {
  func.func @_kd_kernel(%arg0: i32, %arg1: i32, %arg2: memref<8x20xf32, #tpu.memory_space<vmem>>, %arg3: memref<8x20xf32, #tpu.memory_space<vmem>>, %arg4: memref<1x1x20xf32, #tpu.memory_space<vmem>>, %arg5: memref<1x1x1xf32, #tpu.memory_space<vmem>>) attributes {dimension_semantics = [#tpu.dimension_semantics<parallel>, #tpu.dimension_semantics<arbitrary>], iteration_bounds = array<i64: 1, 1>, scalar_prefetch = 0 : i64, scratch_operands = 0 : i64, tpu.core_type = #tpu.core_type<tc>, window_params = [{transform_indices = @transform_0, window_bounds = array<i64: 8, 20>}, {transform_indices = @transform_1, window_bounds = array<i64: 8, 20>}, {transform_indices = @transform_2, window_bounds = array<i64: 1, 1, 20>}, {transform_indices = @transform_3, window_bounds = array<i64: 1, 1, 1>}]} {
    %c0_i32 = arith.constant 0 : i32
    %0 = arith.cmpi eq, %arg1, %c0_i32 : i32
    %1 = arith.extui %0 : i1 to i32
    %c0_i32_0 = arith.constant 0 : i32
    %2 = arith.cmpi ne, %1, %c0_i32_0 : i32
    scf.if %2 {
      %cst_23 = arith.constant 0.000000e+00 : f32
      %43 = vector.broadcast %cst_23 : f32 to vector<1x1x20xf32>
      %c0_24 = arith.constant 0 : index
      %c0_25 = arith.constant 0 : index
      %c0_26 = arith.constant 0 : index
      %44 = vector.load %arg4[%c0_24, %c0_25, %c0_26] : memref<1x1x20xf32, #tpu.memory_space<vmem>>, vector<1x1x20xf32>
      tpu.vector_store %arg4[%c0_24, %c0_25, %c0_26], %43 {strides = array<i32>} : memref<1x1x20xf32, #tpu.memory_space<vmem>>, vector<1x1x20xf32>,
      %cst_27 = arith.constant 0.000000e+00 : f32
      %45 = vector.broadcast %cst_27 : f32 to vector<1x1x1xf32>
      %c0_28 = arith.constant 0 : index
      %c0_29 = arith.constant 0 : index
      %c0_30 = arith.constant 0 : index
      %46 = vector.load %arg5[%c0_28, %c0_29, %c0_30] : memref<1x1x1xf32, #tpu.memory_space<vmem>>, vector<1x1x1xf32>
      tpu.vector_store %arg5[%c0_28, %c0_29, %c0_30], %45 {strides = array<i32>} : memref<1x1x1xf32, #tpu.memory_space<vmem>>, vector<1x1x1xf32>,
    } else {
    }
    %c0 = arith.constant 0 : index
    %c0_1 = arith.constant 0 : index
    %3 = vector.load %arg2[%c0, %c0_1] : memref<8x20xf32, #tpu.memory_space<vmem>>, vector<8x20xf32>
    %cst = arith.constant 2.500000e-01 : f32
    %4 = vector.broadcast %cst : f32 to vector<8x20xf32>
    %5 = arith.mulf %3, %4 : vector<8x20xf32>
    %c0_2 = arith.constant 0 : index
    %c0_3 = arith.constant 0 : index
    %6 = vector.load %arg3[%c0_2, %c0_3] : memref<8x20xf32, #tpu.memory_space<vmem>>, vector<8x20xf32>
    %cst_4 = arith.constant 2.500000e-01 : f32
    %7 = vector.broadcast %cst_4 : f32 to vector<8x20xf32>
    %8 = arith.mulf %6, %7 : vector<8x20xf32>
    %cst_5 = arith.constant dense<0xFF800000> : vector<8xf32>
    %9 = vector.multi_reduction <maximumf>, %5, %cst_5 [1] : vector<8x20xf32> to vector<8xf32>
    %10 = vector.shape_cast %9 : vector<8xf32> to vector<8x1xf32>
    %11 = vector.broadcast %10 : vector<8x1xf32> to vector<8x20xf32>
    %12 = arith.subf %5, %11 : vector<8x20xf32>
    %cst_6 = arith.constant dense<0xFF800000> : vector<8xf32>
    %13 = vector.multi_reduction <maximumf>, %8, %cst_6 [1] : vector<8x20xf32> to vector<8xf32>
    %14 = vector.shape_cast %13 : vector<8xf32> to vector<8x1xf32>
    %15 = vector.broadcast %14 : vector<8x1xf32> to vector<8x20xf32>
    %16 = arith.subf %8, %15 : vector<8x20xf32>
    %17 = math.exp %12 : vector<8x20xf32>
    %18 = math.exp %16 : vector<8x20xf32>
    %cst_7 = arith.constant dense<0.000000e+00> : vector<8xf32>
    %19 = vector.multi_reduction <add>, %17, %cst_7 [1] : vector<8x20xf32> to vector<8xf32>
    %20 = vector.shape_cast %19 : vector<8xf32> to vector<8x1xf32>
    %cst_8 = arith.constant dense<0.000000e+00> : vector<8xf32>
    %21 = vector.multi_reduction <add>, %18, %cst_8 [1] : vector<8x20xf32> to vector<8xf32>
    %22 = vector.shape_cast %21 : vector<8xf32> to vector<8x1xf32>
    %23 = tpu.reciprocal %22 {approx = true} : vector<8x1xf32> -> vector<8x1xf32>
    %24 = vector.broadcast %23 : vector<8x1xf32> to vector<8x20xf32>
    %25 = arith.mulf %18, %24 : vector<8x20xf32>
    %26 = arith.subf %16, %12 : vector<8x20xf32>
    %27 = arith.mulf %25, %26 : vector<8x20xf32>
    %28 = math.log %20 : vector<8x1xf32>
    %29 = math.log %22 : vector<8x1xf32>
    %30 = arith.subf %28, %29 : vector<8x1xf32>
    %c0_9 = arith.constant 0 : index
    %c0_10 = arith.constant 0 : index
    %c0_11 = arith.constant 0 : index
    %31 = vector.load %arg4[%c0_9, %c0_10, %c0_11] : memref<1x1x20xf32, #tpu.memory_space<vmem>>, vector<1x1x20xf32>
    %cst_12 = arith.constant dense<0.000000e+00> : vector<20xf32>
    %32 = vector.multi_reduction <add>, %27, %cst_12 [0] : vector<8x20xf32> to vector<20xf32>
    %33 = vector.shape_cast %32 : vector<20xf32> to vector<1x20xf32>
    %34 = vector.shape_cast %33 : vector<1x20xf32> to vector<1x1x20xf32>
    %35 = arith.addf %31, %34 : vector<1x1x20xf32>
    %c0_13 = arith.constant 0 : index
    %c0_14 = arith.constant 0 : index
    %c0_15 = arith.constant 0 : index
    %36 = vector.load %arg4[%c0_13, %c0_14, %c0_15] : memref<1x1x20xf32, #tpu.memory_space<vmem>>, vector<1x1x20xf32>
    tpu.vector_store %arg4[%c0_13, %c0_14, %c0_15], %35 {strides = array<i32>} : memref<1x1x20xf32, #tpu.memory_space<vmem>>, vector<1x1x20xf32>,
    %c0_16 = arith.constant 0 : index
    %c0_17 = arith.constant 0 : index
    %c0_18 = arith.constant 0 : index
    %37 = vector.load %arg5[%c0_16, %c0_17, %c0_18] : memref<1x1x1xf32, #tpu.memory_space<vmem>>, vector<1x1x1xf32>
    %cst_19 = arith.constant dense<0.000000e+00> : vector<1xf32>
    %38 = vector.multi_reduction <add>, %30, %cst_19 [0] : vector<8x1xf32> to vector<1xf32>
    %39 = vector.shape_cast %38 : vector<1xf32> to vector<1x1xf32>
    %40 = vector.shape_cast %39 : vector<1x1xf32> to vector<1x1x1xf32>
    %41 = arith.addf %37, %40 : vector<1x1x1xf32>
    %c0_20 = arith.constant 0 : index
    %c0_21 = arith.constant 0 : index
    %c0_22 = arith.constant 0 : index
    %42 = vector.load %arg5[%c0_20, %c0_21, %c0_22] : memref<1x1x1xf32, #tpu.memory_space<vmem>>, vector<1x1x1xf32>
    tpu.vector_store %arg5[%c0_20, %c0_21, %c0_22], %41 {strides = array<i32>} : memref<1x1x1xf32, #tpu.memory_space<vmem>>, vector<1x1x1xf32>,
    return
  }
  func.func @transform_0(%arg0: i32, %arg1: i32) -> (i32, i32) {
    %c1_i32 = arith.constant 1 : i32
    %0 = arith.muli %arg0, %c1_i32 : i32
    %1 = arith.addi %0, %arg1 : i32
    %c0_i32 = arith.constant 0 : i32
    %c0_i32_0 = arith.constant 0 : i32
    return %1, %c0_i32 : i32, i32
  }
  func.func @transform_1(%arg0: i32, %arg1: i32) -> (i32, i32) {
    %c1_i32 = arith.constant 1 : i32
    %0 = arith.muli %arg0, %c1_i32 : i32
    %1 = arith.addi %0, %arg1 : i32
    %c0_i32 = arith.constant 0 : i32
    %c0_i32_0 = arith.constant 0 : i32
    return %1, %c0_i32 : i32, i32
  }
  func.func @transform_2(%arg0: i32, %arg1: i32) -> (i32, i32, i32) {
    %c0_i32 = arith.constant 0 : i32
    %c0_i32_0 = arith.constant 0 : i32
    %c0_i32_1 = arith.constant 0 : i32
    return %arg0, %c0_i32, %c0_i32_0 : i32, i32, i32
  }
  func.func @transform_3(%arg0: i32, %arg1: i32) -> (i32, i32, i32) {
    %c0_i32 = arith.constant 0 : i32
    %c0_i32_0 = arith.constant 0 : i32
    %c0_i32_1 = arith.constant 0 : i32
    return %arg0, %c0_i32, %c0_i32_0 : i32, i32, i32
  }
}

</mosaic_0001>

<llo_original>
// kernel: tpu_custom_call.1
$region0: #{tpu_custom_call.1}
  #allocation0 [shape = 'u32[]', space=smem, size = 0x4, offset = 0x4, fixed_abs, tag = 'smem constant byte address 0x4 - core index']
  #allocation1 [shape = 'u32[72,128]{1,0:T(1,128)}', space=vmem, size = 0x9000, scoped, tag = 'internal scratch']
  %s0 = inlined_call_operand.hbm [shape: f32[8,20], index: 0, kind: input, shape index: {}]
  %s1 = inlined_call_operand.hbm [shape: f32[8,20], index: 1, kind: input, shape index: {}]
  %s2 = inlined_call_operand.hbm [shape: f32[1,1,20], index: 2, kind: output, shape index: {0}]
  %s3 = inlined_call_operand.hbm [shape: f32[1,1,1], index: 3, kind: output, shape index: {1}]
  %4 = xla_tuple %s2, %s3
  %s5 = sld [smem:[#allocation0]]
  $region38: #{tpu_custom_call.1} parent=0
    _
  %s7 = ssub.s32 1, %s5
  %s8 = scalar_select 0, %s7, %s5
  $region1: #{tpu_custom_call.1} parent=0
    #allocation2 [shape = 'u8[4096]{0}', space=vmem, size = 0x1000, scoped, tag = 'input window, operand 0, single buffered']
    #allocation3 [shape = 's32[1]{0}', space=sflag, size = 0x4, scoped, tag = 'scoped memory for tpu_custom_call.1']
    #allocation4 [shape = 's32[1]{0}', space=sflag, size = 0x4, scoped, tag = 'scoped memory for tpu_custom_call.1']
    #allocation5 [shape = 'u8[4096]{0}', space=vmem, size = 0x1000, scoped, tag = 'input window, operand 1, single buffered']
    #allocation6 [shape = 's32[1]{0}', space=sflag, size = 0x4, scoped, tag = 'scoped memory for tpu_custom_call.1']
    #allocation7 [shape = 'u8[512]{0}', space=vmem, size = 0x400, scoped, tag = 'output window, operand 0, single buffered']
    #allocation8 [shape = 'u8[512]{0}', space=vmem, size = 0x400, scoped, tag = 'output window, operand 1, single buffered']
    #allocation9 [shape = 's32[1]{0}', space=sflag, size = 0x4, scoped, tag = 'scoped memory for tpu_custom_call.1']
    %9 = vsyncpa [#allocation3], 0
    %10 = vsyncpa [#allocation6], 0
    %11 = vsyncpa [#allocation4], 0
    %12 = vsyncpa [#allocation9], 0
    // Predicated region
    $region2: #{tpu_custom_call.1} parent=1 // pred_check
      _
    $region3: #{tpu_custom_call.1} parent=1 // pred_check_branch
      %14 = sbr.rel (0) target = $region5
    $region4: #{tpu_custom_call.1} parent=1 // pred_region
      %s15 = sadd.s32 0, 0
      %17 = vsyncadd [#allocation3], 0
      %s18 = smul.addr %s15, 8
      %s19 = scalar_lea.hbm %s0, %s18
      %s21 = sshll.u32 %s19, 4
      %s22 = int_to_ptr.hbm [resolvable:$true] %s21
      %s23 = sshll.u32 [#allocation2], 4
      %s24 = int_to_ptr.vmem [resolvable:$true] %s23
      %26 = dma.hbm_to_vmem [thread:$0]  %s22, 128, %s24, [#allocation3]
    $region5: #{tpu_custom_call.1} parent=1 // pred_fallthru
      _
    // Predicated region
    $region6: #{tpu_custom_call.1} parent=1 // pred_check
      _
    $region7: #{tpu_custom_call.1} parent=1 // pred_check_branch
      %28 = sbr.rel (0) target = $region9
    $region8: #{tpu_custom_call.1} parent=1 // pred_region
      %s29 = sadd.s32 0, 0
      %31 = vsyncadd [#allocation6], 0
      %s32 = smul.addr %s29, 8
      %s33 = scalar_lea.hbm %s1, %s32
      %s35 = sshll.u32 %s33, 4
      %s36 = int_to_ptr.hbm [resolvable:$true] %s35
      %s37 = sshll.u32 [#allocation5], 4
      %s38 = int_to_ptr.vmem [resolvable:$true] %s37
      %40 = dma.hbm_to_vmem [thread:$0]  %s36, 128, %s38, [#allocation6]
    $region9: #{tpu_custom_call.1} parent=1 // pred_fallthru
      _
    // Predicated region
    $region10: #{tpu_custom_call.1} parent=1 // pred_check
      _
    $region11: #{tpu_custom_call.1} parent=1 // pred_check_branch
      %42 = sbr.rel (0) target = $region13
    $region12: #{tpu_custom_call.1} parent=1 // pred_region
      %44 = dma.done [#allocation3], 128
    $region13: #{tpu_custom_call.1} parent=1 // pred_fallthru
      _
    // Predicated region
    $region14: #{tpu_custom_call.1} parent=1 // pred_check
      _
    $region15: #{tpu_custom_call.1} parent=1 // pred_check_branch
      %46 = sbr.rel (0) target = $region17
    $region16: #{tpu_custom_call.1} parent=1 // pred_region
      %48 = dma.done [#allocation6], 128
    $region17: #{tpu_custom_call.1} parent=1 // pred_fallthru
      _
    %s49 = sadd.s32 0, 0
    %s50 = sadd.s32 0, 0
    %p51 = scmp.eq.s32.totalorder 0, 0
    // Predicated region
    $region18: #{tpu_custom_call.1} parent=1 // pred_check
      %p52 = pneg %p51
    $region19: #{tpu_custom_call.1} parent=1 // pred_check_branch
      %54 = sbr.rel (%p52) target = $region21
    $region20: #{tpu_custom_call.1} parent=1 // pred_region
      %vm55 = vcmask 155648
      %56 = vst.msk [vmem:[#allocation7] sm:$0x1] %vm55, 0.0
      %vm57 = vcmask 0
      %58 = vst.msk [vmem:[#allocation8] sm:$0x1] %vm57, 0.0
    $region21: #{tpu_custom_call.1} parent=1 // pred_fallthru
      _
    %v59 = vld [vmem:[#allocation2] sm:$0xff]
    %v60 = vmul.f32 %v59, 0.25
    %v61 = vld [vmem:[#allocation5] sm:$0xff]
    %v62 = vmul.f32 %v61, 0.25
    %vm63 = vcmask 162816
    %v64 = vsel %vm63, %v60, -inf
    %65 = vmax.xlane.f32.xlu0 %v64
    %v66 = vpop.xlane.xlu0 %65
    %v67 = vsub.f32 %v60, %v66
    %v68 = vsel %vm63, %v62, -inf
    %69 = vmax.xlane.f32.xlu0 %v68
    %v70 = vpop.xlane.xlu0 %69
    %v71 = vsub.f32 %v62, %v70
    %v72 = vmul.f32 %v67, 1.442695
    %v73 = vpow.pop %v72
    %v74 = vmul.f32 %v71, 1.442695
    %v75 = vpow.pop %v74
    %v76 = vsel %vm63, %v73, 0.0
    %77 = vadd.xlane.f32.xlu0 %v76
    %v78 = vpop.xlane.xlu0 %77
    %v79 = vsel %vm63, %v75, 0.0
    %80 = vadd.xlane.f32.xlu0 %v79
    %v81 = vpop.xlane.xlu0 %80
    %v82 = vrcp.pop %v81
    %v83 = vmul.f32 %v75, %v82
    %v84 = vsub.f32 %v71, %v67
    %v85 = vmul.f32 %v83, %v84
    %v86 = vlog2.pop %v78
    %v87 = vmul.f32 %v86, 0.6931472
    %v88 = vlog2.pop %v81
    %v89 = vmul.f32 %v88, 0.6931472
    %v90 = vsub.f32 %v87, %v89
    %v91 = vld [vmem:[#allocation7] sm:$0x1]
    %v92 = vsel %vm63, %v85, 0.0
    %v93 = vrot.slane %v92, 4
    %v94 = vadd.f32 %v92, %v93
    %v95 = vrot.slane %v94, 2
    %v96 = vadd.f32 %v94, %v95
    %v97 = vrot.slane %v96, 1
    %v98 = vadd.f32 %v96, %v97
    %v99 = vadd.f32 %v91, %v98
    %vm100 = vcmask 155648
    %101 = vst.msk [vmem:[#allocation7] sm:$0x1] %vm100, %v99
    %v102 = vld [vmem:[#allocation8] sm:$0x1]
    %v103 = vrot.slane %v90, 4
    %v104 = vadd.f32 %v90, %v103
    %v105 = vrot.slane %v104, 2
    %v106 = vadd.f32 %v104, %v105
    %v107 = vrot.slane %v106, 1
    %v108 = vadd.f32 %v106, %v107
    %v109 = vadd.f32 %v102, %v108
    %vm110 = vcmask 0
    %111 = vst.msk [vmem:[#allocation8] sm:$0x1] %vm110, %v109
    // Predicated region
    $region22: #{tpu_custom_call.1} parent=1 // pred_check
      _
    $region23: #{tpu_custom_call.1} parent=1 // pred_check_branch
      %113 = sbr.rel (0) target = $region25
    $region24: #{tpu_custom_call.1} parent=1 // pred_region
      %115 = vsyncadd [#allocation4], 0
      %s117 = sshll.u32 [#allocation7], 4
      %s118 = int_to_ptr.vmem [resolvable:$true] %s117
      %s119 = sshll.u32 %s2, 4
      %s120 = int_to_ptr.hbm [resolvable:$true] %s119
      %122 = dma.vmem_to_hbm [thread:$0]  %s118, 16, %s120, [#allocation4]
    $region25: #{tpu_custom_call.1} parent=1 // pred_fallthru
      _
    // Predicated region
    $region26: #{tpu_custom_call.1} parent=1 // pred_check
      _
    $region27: #{tpu_custom_call.1} parent=1 // pred_check_branch
      %124 = sbr.rel (0) target = $region29
    $region28: #{tpu_custom_call.1} parent=1 // pred_region
      %126 = vsyncadd [#allocation9], 0
      %s128 = sshll.u32 [#allocation8], 4
      %s129 = int_to_ptr.vmem [resolvable:$true] %s128
      %s130 = sshll.u32 %s3, 4
      %s131 = int_to_ptr.hbm [resolvable:$true] %s130
      %133 = dma.vmem_to_hbm [thread:$0]  %s129, 16, %s131, [#allocation9]
    $region29: #{tpu_custom_call.1} parent=1 // pred_fallthru
      _
    // Predicated region
    $region30: #{tpu_custom_call.1} parent=1 // pred_check
      _
    $region31: #{tpu_custom_call.1} parent=1 // pred_check_branch
      %135 = sbr.rel (0) target = $region33
    $region32: #{tpu_custom_call.1} parent=1 // pred_region
      %137 = dma.done [#allocation4], 16
    $region33: #{tpu_custom_call.1} parent=1 // pred_fallthru
      _
    // Predicated region
    $region34: #{tpu_custom_call.1} parent=1 // pred_check
      _
    $region35: #{tpu_custom_call.1} parent=1 // pred_check_branch
      %139 = sbr.rel (0) target = $region37
    $region36: #{tpu_custom_call.1} parent=1 // pred_region
      %141 = dma.done [#allocation9], 16
    $region37: #{tpu_custom_call.1} parent=1 // pred_fallthru
      _
    %142 = vsyncpa [#allocation3], 1
    %143 = vsyncpa [#allocation6], 1
    %144 = vsyncpa [#allocation4], 1
    %145 = vsyncpa [#allocation9], 1

</llo_original>
